<compile_context>
chip_gen: v7x
topology: tpu7x:2x2x1
jax: 0.10.0
libtpu: 0.0.40
codegen_flags: <defaults>
</compile_context>

<pallas_src>
import functools

import jax
import jax.numpy as jnp
from jax.experimental import pallas as pl
from jax.experimental.pallas import tpu as pltpu


def _atac_kernel(has_g, *refs):
    if has_g:
        (w1_row_ref, w1_col_ref, w2_ref, alpha_ref, t_t_ref,
         g_t_ref, out_t_ref) = refs
    else:
        (w1_row_ref, w1_col_ref, w2_ref, alpha_ref, t_t_ref,
         out_t_ref) = refs
        g_t_ref = None

    # leaky_relu(w1), default negative_slope = 0.01, in both layouts:
    #   a_row (1, b): peak index on the lane axis   (for alpha*a and softmax)
    #   a_col (b, 1): peak index on the sublane axis (to scale rows of w2)
    w1r = w1_row_ref[...]                                  # (1, b)
    w1c = w1_col_ref[...]                                  # (b, 1)
    a_row = jnp.where(w1r > 0, w1r, 0.01 * w1r)            # (1, b)
    a_col = jnp.where(w1c > 0, w1c, 0.01 * w1c)            # (b, 1)

    # All rows of z are identical (rank-1):
    #   z_row[j] = sum_k a[k] * w2[k, j] + alpha[j] * a[j]
    # Computed as a VPU row-scale of w2 + sublane reduce (MXU not needed for
    # a single output row).
    z_row = jnp.sum(w2_ref[...] * a_col, axis=0, keepdims=True)   # (1, b)
    z_row = z_row + alpha_ref[...] * a_row                        # (1, b)

    # softmax over the single row (dim=1 in the PyTorch module).
    z_max = jnp.max(z_row, axis=1, keepdims=True)
    ez = jnp.exp(z_row - z_max)
    denom = jnp.sum(ez, axis=1, keepdims=True)
    gamma_row = ez * pl.reciprocal(denom, approx=True)            # (1, b)

    # E is rank-1 too.  With T^T laid out (d, b) (lane-dense in b):
    #   e_col[j] = sum_k gamma[k] * T[k, j]            -> (d, 1)
    e_col = jnp.sum(t_t_ref[...] * gamma_row, axis=1, keepdims=True)

    out_t = jnp.broadcast_to(e_col, out_t_ref.shape)              # (d, b)
    if g_t_ref is not None:
        out_t = out_t + g_t_ref[...]
    out_t_ref[...] = out_t.astype(out_t_ref.dtype)


def atac_embedding(x, w1, w2, alpha, T, G=None):
    """Pallas equivalent of AtacEmbedding.forward.

    x:     (batch, b)  -- only its second dim is used (as in the PyTorch code).
    w1:    (1, b); w2: (b, b); alpha: (b,); T: (b, d)
    G:     (b, d) node2vec embeddings, or None (== the zeros buffer).
    Returns (b, d) float32.

    The result does not depend on x's values -- callers should compute it once
    per parameter update, not once per batch element.
    """
    b, d = T.shape
    assert x.shape[1] == b, "x.size(1) must equal number of peaks b"

    w1_row = w1.reshape(1, b)
    w1_col = w1.reshape(b, 1)
    alpha2d = alpha.reshape(1, b)
    t_t = T.T                                   # (d, b): b on the lane axis

    operands = [w1_row, w1_col, w2, alpha2d, t_t]
    has_g = G is not None
    if has_g:
        operands.append(G.T)                    # (d, b)

    out_t = pl.pallas_call(
        functools.partial(_atac_kernel, has_g),
        out_shape=jax.ShapeDtypeStruct((d, b), jnp.float32),
        in_specs=[pl.BlockSpec(memory_space=pltpu.MemorySpace.VMEM)
                  for _ in operands],
        out_specs=pl.BlockSpec(memory_space=pltpu.MemorySpace.VMEM),
    )(*operands)

    return out_t.T                              # back to (b, d)


def _reference(x, w1, w2, alpha, T, G):
    """Pure-JAX reference mirroring the PyTorch forward exactly."""
    b = x.shape[1]
    a = jnp.where(w1 > 0, w1, 0.01 * w1)
    a = jnp.broadcast_to(a, (b, b))
    z = a @ w2 + alpha * a
    gamma = jax.nn.softmax(z, axis=1)
    E = gamma @ T
    return E + (G if G is not None else 0.0)


if __name__ == "__main__":
    # Small shapes consistent with the module: batch=2, b (num_peaks)=128, d=32.
    batch, b, d = 2, 128, 32

    key = jax.random.PRNGKey(0)
    kx, k1, k2, ka, kt, kg = jax.random.split(key, 6)

    x = jax.random.normal(kx, (batch, b), dtype=jnp.float32)
    w1 = jax.random.normal(k1, (1, b), dtype=jnp.float32)
    w2 = jax.random.normal(k2, (b, b), dtype=jnp.float32)
    alpha = jax.random.normal(ka, (b,), dtype=jnp.float32)
    T = jax.random.normal(kt, (b, d), dtype=jnp.float32)
    G = jax.random.normal(kg, (b, d), dtype=jnp.float32)

    fwd = jax.jit(atac_embedding)

    # Case 1: node2vec=None -> zeros buffer; the kernel skips the G DMA + add.
    out0 = jax.block_until_ready(fwd(x, w1, w2, alpha, T, None))
    ref0 = _reference(x, w1, w2, alpha, T, None)
    assert out0.shape == (b, d)
    # approx reciprocal in the softmax denominator -> slightly looser tolerance.
    assert jnp.allclose(out0, ref0, atol=2e-3, rtol=2e-3), "mismatch (G=None)"

    # Case 2: node2vec provided.
    out1 = jax.block_until_ready(fwd(x, w1, w2, alpha, T, G))
    ref1 = _reference(x, w1, w2, alpha, T, G)
    assert out1.shape == (b, d)
    assert jnp.allclose(out1, ref1, atol=2e-3, rtol=2e-3), "mismatch (with G)"

    print("KERNEL_OK")
</pallas_src>

<mosaic_0001>
module attributes {stable_mosaic.version = 11 : i64} {
  func.func @_atac_kernel(%arg0: memref<1x128xf32, #tpu.memory_space<vmem>>, %arg1: memref<128x1xf32, #tpu.memory_space<vmem>>, %arg2: memref<128x128xf32, #tpu.memory_space<vmem>>, %arg3: memref<1x128xf32, #tpu.memory_space<vmem>>, %arg4: memref<32x128xf32, #tpu.memory_space<vmem>>, %arg5: memref<32x128xf32, #tpu.memory_space<vmem>>) attributes {dimension_semantics = [], scalar_prefetch = 0 : i64, scratch_operands = 0 : i64, tpu.core_type = #tpu.core_type<tc>} {
    %c0 = arith.constant 0 : index
    %c0_0 = arith.constant 0 : index
    %0 = vector.load %arg0[%c0, %c0_0] : memref<1x128xf32, #tpu.memory_space<vmem>>, vector<1x128xf32>
    %c0_1 = arith.constant 0 : index
    %c0_2 = arith.constant 0 : index
    %1 = vector.load %arg1[%c0_1, %c0_2] : memref<128x1xf32, #tpu.memory_space<vmem>>, vector<128x1xf32>
    %cst = arith.constant 0.000000e+00 : f32
    %2 = vector.broadcast %cst : f32 to vector<1x128xf32>
    %3 = arith.cmpf ogt, %0, %2 : vector<1x128xf32>
    %cst_3 = arith.constant 0.00999999977 : f32
    %4 = vector.broadcast %cst_3 : f32 to vector<1x128xf32>
    %5 = arith.mulf %4, %0 : vector<1x128xf32>
    %6 = arith.select %3, %0, %5 : vector<1x128xi1>, vector<1x128xf32>
    %cst_4 = arith.constant 0.000000e+00 : f32
    %7 = vector.broadcast %cst_4 : f32 to vector<128x1xf32>
    %8 = arith.cmpf ogt, %1, %7 : vector<128x1xf32>
    %cst_5 = arith.constant 0.00999999977 : f32
    %9 = vector.broadcast %cst_5 : f32 to vector<128x1xf32>
    %10 = arith.mulf %9, %1 : vector<128x1xf32>
    %11 = arith.select %8, %1, %10 : vector<128x1xi1>, vector<128x1xf32>
    %c0_6 = arith.constant 0 : index
    %c0_7 = arith.constant 0 : index
    %12 = vector.load %arg2[%c0_6, %c0_7] : memref<128x128xf32, #tpu.memory_space<vmem>>, vector<128x128xf32>
    %13 = vector.broadcast %11 : vector<128x1xf32> to vector<128x128xf32>
    %14 = arith.mulf %12, %13 : vector<128x128xf32>
    %cst_8 = arith.constant dense<0.000000e+00> : vector<128xf32>
    %15 = vector.multi_reduction <add>, %14, %cst_8 [0] : vector<128x128xf32> to vector<128xf32>
    %16 = vector.shape_cast %15 : vector<128xf32> to vector<1x128xf32>
    %c0_9 = arith.constant 0 : index
    %c0_10 = arith.constant 0 : index
    %17 = vector.load %arg3[%c0_9, %c0_10] : memref<1x128xf32, #tpu.memory_space<vmem>>, vector<1x128xf32>
    %18 = arith.mulf %17, %6 : vector<1x128xf32>
    %19 = arith.addf %16, %18 : vector<1x128xf32>
    %cst_11 = arith.constant dense<0xFF800000> : vector<1xf32>
    %20 = vector.multi_reduction <maximumf>, %19, %cst_11 [1] : vector<1x128xf32> to vector<1xf32>
    %21 = vector.shape_cast %20 : vector<1xf32> to vector<1x1xf32>
    %22 = vector.broadcast %21 : vector<1x1xf32> to vector<1x128xf32>
    %23 = arith.subf %19, %22 : vector<1x128xf32>
    %24 = math.exp %23 : vector<1x128xf32>
    %cst_12 = arith.constant dense<0.000000e+00> : vector<1xf32>
    %25 = vector.multi_reduction <add>, %24, %cst_12 [1] : vector<1x128xf32> to vector<1xf32>
    %26 = vector.shape_cast %25 : vector<1xf32> to vector<1x1xf32>
    %27 = tpu.reciprocal %26 {approx = true} : vector<1x1xf32> -> vector<1x1xf32>
    %28 = vector.broadcast %27 : vector<1x1xf32> to vector<1x128xf32>
    %29 = arith.mulf %24, %28 : vector<1x128xf32>
    %c0_13 = arith.constant 0 : index
    %c0_14 = arith.constant 0 : index
    %30 = vector.load %arg4[%c0_13, %c0_14] : memref<32x128xf32, #tpu.memory_space<vmem>>, vector<32x128xf32>
    %31 = vector.broadcast %29 : vector<1x128xf32> to vector<32x128xf32>
    %32 = arith.mulf %30, %31 : vector<32x128xf32>
    %cst_15 = arith.constant dense<0.000000e+00> : vector<32xf32>
    %33 = vector.multi_reduction <add>, %32, %cst_15 [1] : vector<32x128xf32> to vector<32xf32>
    %34 = vector.shape_cast %33 : vector<32xf32> to vector<32x1xf32>
    %35 = vector.shape_cast %34 : vector<32x1xf32> to vector<32x1xf32>
    %36 = vector.broadcast %35 : vector<32x1xf32> to vector<32x128xf32>
    %c0_16 = arith.constant 0 : index
    %c0_17 = arith.constant 0 : index
    %37 = vector.load %arg5[%c0_16, %c0_17] : memref<32x128xf32, #tpu.memory_space<vmem>>, vector<32x128xf32>
    tpu.vector_store %arg5[%c0_16, %c0_17], %36 {strides = array<i32>} : memref<32x128xf32, #tpu.memory_space<vmem>>, vector<32x128xf32>,
    return
  }
}

</mosaic_0001>

<llo_original>
// kernel: atac_embedding.1
$region0: #{atac_embedding.1}
  #allocation0 [shape = 'u32[]', space=smem, size = 0x4, offset = 0x4, fixed_abs, tag = 'smem constant byte address 0x4 - core index']
  #allocation1 [shape = 'u32[144,128]{1,0:T(1,128)}', space=vmem, size = 0x12000, scoped, tag = 'internal scratch']
  %s0 = inlined_call_operand.vmem [shape: f32[1,128], index: 0, kind: input, shape index: {}]
  %s1 = inlined_call_operand.vmem [shape: f32[128,1], index: 1, kind: input, shape index: {}]
  %s2 = inlined_call_operand.vmem [shape: f32[128,128], index: 2, kind: input, shape index: {}]
  %s3 = inlined_call_operand.vmem [shape: f32[1,128], index: 3, kind: input, shape index: {}]
  %s4 = inlined_call_operand.hbm [shape: f32[32,128], index: 4, kind: input, shape index: {}]
  %s5 = inlined_call_operand.hbm [shape: f32[32,128], index: 5, kind: output, shape index: {}]
  %s6 = sld [smem:[#allocation0]]
  $region34: #{atac_embedding.1} parent=0
    _
  %s8 = ssub.s32 1, %s6
  %s9 = scalar_select 0, %s8, %s6
  $region1: #{atac_embedding.1} parent=0
    #allocation2 [shape = 'u8[16384]{0}', space=vmem, size = 0x4000, scoped, tag = 'input window, operand 4, single buffered']
    #allocation3 [shape = 's32[1]{0}', space=sflag, size = 0x4, scoped, tag = 'scoped memory for atac_embedding.1']
    #allocation4 [shape = 's32[1]{0}', space=sflag, size = 0x4, scoped, tag = 'scoped memory for atac_embedding.1']
    #allocation5 [shape = 'u8[16384]{0}', space=vmem, size = 0x4000, scoped, tag = 'output window, operand 0, single buffered']
    %10 = vsyncpa [#allocation3], 0
    %11 = vsyncpa [#allocation4], 0
    // Predicated region
    $region2: #{atac_embedding.1} parent=1 // pred_check
      _
    $region3: #{atac_embedding.1} parent=1 // pred_check_branch
      %13 = sbr.rel (0) target = $region5
    $region4: #{atac_embedding.1} parent=1 // pred_region
      _
    $region5: #{atac_embedding.1} parent=1 // pred_fallthru
      _
    // Predicated region
    $region6: #{atac_embedding.1} parent=1 // pred_check
      _
    $region7: #{atac_embedding.1} parent=1 // pred_check_branch
      %15 = sbr.rel (0) target = $region9
    $region8: #{atac_embedding.1} parent=1 // pred_region
      _
    $region9: #{atac_embedding.1} parent=1 // pred_fallthru
      _
    // Predicated region
    $region10: #{atac_embedding.1} parent=1 // pred_check
      _
    $region11: #{atac_embedding.1} parent=1 // pred_check_branch
      %17 = sbr.rel (0) target = $region13
    $region12: #{atac_embedding.1} parent=1 // pred_region
      _
    $region13: #{atac_embedding.1} parent=1 // pred_fallthru
      _
    // Predicated region
    $region14: #{atac_embedding.1} parent=1 // pred_check
      _
    $region15: #{atac_embedding.1} parent=1 // pred_check_branch
      %19 = sbr.rel (0) target = $region17
    $region16: #{atac_embedding.1} parent=1 // pred_region
      _
    $region17: #{atac_embedding.1} parent=1 // pred_fallthru
      _
    // Predicated region
    $region18: #{atac_embedding.1} parent=1 // pred_check
      _
    $region19: #{atac_embedding.1} parent=1 // pred_check_branch
      %21 = sbr.rel (0) target = $region21
    $region20: #{atac_embedding.1} parent=1 // pred_region
      %s23 = ssub.s32 512, 512
      %24 = vsyncadd [#allocation3], %s23
      %s25 = sshll.u32 [#allocation2], 4
      %s26 = int_to_ptr.vmem [resolvable:$true] %s25
      %31 = dma.hbm_to_vmem [thread:$0]  %s4, 512, %s26, [#allocation3], 128, 128, 8
    $region21: #{atac_embedding.1} parent=1 // pred_fallthru
      _
    // Predicated region
    $region22: #{atac_embedding.1} parent=1 // pred_check
      _
    $region23: #{atac_embedding.1} parent=1 // pred_check_branch
      %33 = sbr.rel (0) target = $region25
    $region24: #{atac_embedding.1} parent=1 // pred_region
      %34 = dma.done [#allocation3], 512
    $region25: #{atac_embedding.1} parent=1 // pred_fallthru
      _
    %v35 = vld [vmem:[%s0] sm:$0x1]
    %v36 = vld [vmem:[%s1] sm:$0xff]
    %v37 = vld [vmem:[%s1 + $0x8] sm:$0xff]
    %v38 = vld [vmem:[%s1 + $0x10] sm:$0xff]
    %v39 = vld [vmem:[%s1 + $0x18] sm:$0xff]
    %v40 = vld [vmem:[%s1 + $0x20] sm:$0xff]
    %v41 = vld [vmem:[%s1 + $0x28] sm:$0xff]
    %v42 = vld [vmem:[%s1 + $0x30] sm:$0xff]
    %v43 = vld [vmem:[%s1 + $0x38] sm:$0xff]
    %v44 = vld [vmem:[%s1 + $0x40] sm:$0xff]
    %v45 = vld [vmem:[%s1 + $0x48] sm:$0xff]
    %v46 = vld [vmem:[%s1 + $0x50] sm:$0xff]
    %v47 = vld [vmem:[%s1 + $0x58] sm:$0xff]
    %v48 = vld [vmem:[%s1 + $0x60] sm:$0xff]
    %v49 = vld [vmem:[%s1 + $0x68] sm:$0xff]
    %v50 = vld [vmem:[%s1 + $0x70] sm:$0xff]
    %v51 = vld [vmem:[%s1 + $0x78] sm:$0xff]
    %vm52 = vcmp.gt.f32.partialorder %v35, 0.0
    %v53 = vmul.f32 %v35, 0.01
    %v54 = vsel %vm52, %v35, %v53
    %vm55 = vcmp.gt.f32.partialorder %v36, 0.0
    %vm56 = vcmp.gt.f32.partialorder %v37, 0.0
    %vm57 = vcmp.gt.f32.partialorder %v38, 0.0
    %vm58 = vcmp.gt.f32.partialorder %v39, 0.0
    %vm59 = vcmp.gt.f32.partialorder %v40, 0.0
    %vm60 = vcmp.gt.f32.partialorder %v41, 0.0
    %vm61 = vcmp.gt.f32.partialorder %v42, 0.0
    %vm62 = vcmp.gt.f32.partialorder %v43, 0.0
    %vm63 = vcmp.gt.f32.partialorder %v44, 0.0
    %vm64 = vcmp.gt.f32.partialorder %v45, 0.0
    %vm65 = vcmp.gt.f32.partialorder %v46, 0.0
    %vm66 = vcmp.gt.f32.partialorder %v47, 0.0
    %vm67 = vcmp.gt.f32.partialorder %v48, 0.0
    %vm68 = vcmp.gt.f32.partialorder %v49, 0.0
    %vm69 = vcmp.gt.f32.partialorder %v50, 0.0
    %vm70 = vcmp.gt.f32.partialorder %v51, 0.0
    %v71 = vmul.f32 %v36, 0.01
    %v72 = vmul.f32 %v37, 0.01
    %v73 = vmul.f32 %v38, 0.01
    %v74 = vmul.f32 %v39, 0.01
    %v75 = vmul.f32 %v40, 0.01
    %v76 = vmul.f32 %v41, 0.01
    %v77 = vmul.f32 %v42, 0.01
    %v78 = vmul.f32 %v43, 0.01
    %v79 = vmul.f32 %v44, 0.01
    %v80 = vmul.f32 %v45, 0.01
    %v81 = vmul.f32 %v46, 0.01
    %v82 = vmul.f32 %v47, 0.01
    %v83 = vmul.f32 %v48, 0.01
    %v84 = vmul.f32 %v49, 0.01
    %v85 = vmul.f32 %v50, 0.01
    %v86 = vmul.f32 %v51, 0.01
    %v87 = vsel %vm55, %v36, %v71
    %v88 = vsel %vm56, %v37, %v72
    %v89 = vsel %vm57, %v38, %v73
    %v90 = vsel %vm58, %v39, %v74
    %v91 = vsel %vm59, %v40, %v75
    %v92 = vsel %vm60, %v41, %v76
    %v93 = vsel %vm61, %v42, %v77
    %v94 = vsel %vm62, %v43, %v78
    %v95 = vsel %vm63, %v44, %v79
    %v96 = vsel %vm64, %v45, %v80
    %v97 = vsel %vm65, %v46, %v81
    %v98 = vsel %vm66, %v47, %v82
    %v99 = vsel %vm67, %v48, %v83
    %v100 = vsel %vm68, %v49, %v84
    %v101 = vsel %vm69, %v50, %v85
    %v102 = vsel %vm70, %v51, %v86
    %v103 = vld [vmem:[%s2] sm:$0xff]
    %v104 = vld [vmem:[%s2 + $0x8] sm:$0xff]
    %v105 = vld [vmem:[%s2 + $0x10] sm:$0xff]
    %v106 = vld [vmem:[%s2 + $0x18] sm:$0xff]
    %v107 = vld [vmem:[%s2 + $0x20] sm:$0xff]
    %v108 = vld [vmem:[%s2 + $0x28] sm:$0xff]
    %v109 = vld [vmem:[%s2 + $0x30] sm:$0xff]
    %v110 = vld [vmem:[%s2 + $0x38] sm:$0xff]
    %v111 = vld [vmem:[%s2 + $0x40] sm:$0xff]
    %v112 = vld [vmem:[%s2 + $0x48] sm:$0xff]
    %v113 = vld [vmem:[%s2 + $0x50] sm:$0xff]
    %v114 = vld [vmem:[%s2 + $0x58] sm:$0xff]
    %v115 = vld [vmem:[%s2 + $0x60] sm:$0xff]
    %v116 = vld [vmem:[%s2 + $0x68] sm:$0xff]
    %v117 = vld [vmem:[%s2 + $0x70] sm:$0xff]
    %v118 = vld [vmem:[%s2 + $0x78] sm:$0xff]
    %120 = vset.pattern.permute.xlu0 0
    %121 = vperm.xlu0 %120, %v87
    %v122 = vpop.permute.xlu0 %121
    %125 = vset.pattern.permute.xlu0 0
    %126 = vperm.xlu0 %125, %v88
    %v127 = vpop.permute.xlu0 %126
    %130 = vset.pattern.permute.xlu0 0
    %131 = vperm.xlu0 %130, %v89
    %v132 = vpop.permute.xlu0 %131
    %135 = vset.pattern.permute.xlu0 0
    %136 = vperm.xlu0 %135, %v90
    %v137 = vpop.permute.xlu0 %136
    %140 = vset.pattern.permute.xlu0 0
    %141 = vperm.xlu0 %140, %v91
    %v142 = vpop.permute.xlu0 %141
    %145 = vset.pattern.permute.xlu0 0
    %146 = vperm.xlu0 %145, %v92
    %v147 = vpop.permute.xlu0 %146
    %150 = vset.pattern.permute.xlu0 0
    %151 = vperm.xlu0 %150, %v93
    %v152 = vpop.permute.xlu0 %151
    %155 = vset.pattern.permute.xlu0 0
    %156 = vperm.xlu0 %155, %v94
    %v157 = vpop.permute.xlu0 %156
    %160 = vset.pattern.permute.xlu0 0
    %161 = vperm.xlu0 %160, %v95
    %v162 = vpop.permute.xlu0 %161
    %165 = vset.pattern.permute.xlu0 0
    %166 = vperm.xlu0 %165, %v96
    %v167 = vpop.permute.xlu0 %166
    %170 = vset.pattern.permute.xlu0 0
    %171 = vperm.xlu0 %170, %v97
    %v172 = vpop.permute.xlu0 %171
    %175 = vset.pattern.permute.xlu0 0
    %176 = vperm.xlu0 %175, %v98
    %v177 = vpop.permute.xlu0 %176
    %180 = vset.pattern.permute.xlu0 0
    %181 = vperm.xlu0 %180, %v99
    %v182 = vpop.permute.xlu0 %181
    %185 = vset.pattern.permute.xlu0 0
    %186 = vperm.xlu0 %185, %v100
    %v187 = vpop.permute.xlu0 %186
    %190 = vset.pattern.permute.xlu0 0
    %191 = vperm.xlu0 %190, %v101
    %v192 = vpop.permute.xlu0 %191
    %195 = vset.pattern.permute.xlu0 0
    %196 = vperm.xlu0 %195, %v102
    %v197 = vpop.permute.xlu0 %196
    %v199 = vmul.f32 %v103, %v122
    %v200 = vmul.f32 %v104, %v127
    %v201 = vmul.f32 %v105, %v132
    %v202 = vmul.f32 %v106, %v137
    %v203 = vmul.f32 %v107, %v142
    %v204 = vmul.f32 %v108, %v147
    %v205 = vmul.f32 %v109, %v152
    %v206 = vmul.f32 %v110, %v157
    %v207 = vmul.f32 %v111, %v162
    %v208 = vmul.f32 %v112, %v167
    %v209 = vmul.f32 %v113, %v172
    %v210 = vmul.f32 %v114, %v177
    %v211 = vmul.f32 %v115, %v182
    %v212 = vmul.f32 %v116, %v187
    %v213 = vmul.f32 %v117, %v192
    %v214 = vmul.f32 %v118, %v197
    %v215 = vadd.f32 %v199, %v200
    %v216 = vadd.f32 %v215, %v201
    %v217 = vadd.f32 %v216, %v202
    %v218 = vadd.f32 %v217, %v203
    %v219 = vadd.f32 %v218, %v204
    %v220 = vadd.f32 %v219, %v205
    %v221 = vadd.f32 %v220, %v206
    %v222 = vadd.f32 %v221, %v207
    %v223 = vadd.f32 %v222, %v208
    %v224 = vadd.f32 %v223, %v209
    %v225 = vadd.f32 %v224, %v210
    %v226 = vadd.f32 %v225, %v211
    %v227 = vadd.f32 %v226, %v212
    %v228 = vadd.f32 %v227, %v213
    %v229 = vadd.f32 %v228, %v214
    %v230 = vrot.slane %v229, 4
    %v231 = vadd.f32 %v229, %v230
    %v232 = vrot.slane %v231, 2
    %v233 = vadd.f32 %v231, %v232
    %v234 = vrot.slane %v233, 1
    %v235 = vadd.f32 %v233, %v234
    %v236 = vld [vmem:[%s3] sm:$0x1]
    %v237 = vmul.f32 %v236, %v54
    %v238 = vadd.f32 %v235, %v237
    %vm239 = vcmask 1040384
    %v240 = vsel %vm239, %v238, -inf
    %241 = vmax.xlane.f32.xlu0 %v240
    %v242 = vpop.xlane.xlu0 %241
    %v243 = vsub.f32 %v238, %v242
    %v244 = vmul.f32 %v243, 1.442695
    %v245 = vpow.pop %v244
    %v246 = vsel %vm239, %v245, 0.0
    %247 = vadd.xlane.f32.xlu0 %v246
    %v248 = vpop.xlane.xlu0 %247
    %v249 = vrcp.pop %v248
    %v250 = vmul.f32 %v245, %v249
    %v251 = vld [vmem:[#allocation2] sm:$0xff]
    %v252 = vld [vmem:[#allocation2 + $0x8] sm:$0xff]
    %v253 = vld [vmem:[#allocation2 + $0x10] sm:$0xff]
    %v254 = vld [vmem:[#allocation2 + $0x18] sm:$0xff]
    %v255 = vlaneseq
    %v256 = vshrl.u32 %v255, 7
    %v257 = vsub.s32 0, %v256
    %v258 = vrot.slane %v250, %v257
    %v259 = vmul.f32 %v251, %v258
    %v260 = vmul.f32 %v252, %v258
    %v261 = vmul.f32 %v253, %v258
    %v262 = vmul.f32 %v254, %v258
    %263 = vadd.xlane.f32.xlu0 %v259
    %v264 = vpop.xlane.xlu0 %263
    %265 = vadd.xlane.f32.xlu0 %v260
    %v266 = vpop.xlane.xlu0 %265
    %267 = vadd.xlane.f32.xlu0 %v261
    %v268 = vpop.xlane.xlu0 %267
    %269 = vadd.xlane.f32.xlu0 %v262
    %v270 = vpop.xlane.xlu0 %269
    %271 = vst [vmem:[#allocation5] sm:$0xff] %v264
    %272 = vst [vmem:[#allocation5 + $0x8] sm:$0xff] %v266
    %273 = vst [vmem:[#allocation5 + $0x10] sm:$0xff] %v268
    %274 = vst [vmem:[#allocation5 + $0x18] sm:$0xff] %v270
    // Predicated region
    $region26: #{atac_embedding.1} parent=1 // pred_check
      _
    $region27: #{atac_embedding.1} parent=1 // pred_check_branch
      %276 = sbr.rel (0) target = $region29
    $region28: #{atac_embedding.1} parent=1 // pred_region
      %s278 = ssub.s32 512, 512
      %279 = vsyncadd [#allocation4], %s278
      %s280 = sshll.u32 [#allocation5], 4
      %s281 = int_to_ptr.vmem [resolvable:$true] %s280
      %286 = dma.vmem_to_hbm [thread:$0]  %s281, 512, %s5, [#allocation4], 128, 128, 8
    $region29: #{atac_embedding.1} parent=1 // pred_fallthru
      _
    // Predicated region
    $region30: #{atac_embedding.1} parent=1 // pred_check
      _
    $region31: #{atac_embedding.1} parent=1 // pred_check_branch
      %288 = sbr.rel (0) target = $region33
    $region32: #{atac_embedding.1} parent=1 // pred_region
      %289 = dma.done [#allocation4], 512
    $region33: #{atac_embedding.1} parent=1 // pred_fallthru
      _
    %290 = vsyncpa [#allocation3], 1
    %291 = vsyncpa [#allocation4], 1

</llo_original>
